<compile_context>
chip_gen: v7x
topology: tpu7x:2x2x1
jax: 0.10.0
libtpu: 0.0.40
codegen_flags: <defaults>
</compile_context>

<pallas_src>
import functools

import jax
import jax.numpy as jnp
from jax import lax
from jax.experimental import pallas as pl
from jax.experimental.pallas import tpu as pltpu


def _adailn_kernel(x_ref, gamma_ref, beta_ref, rho_ref, o_ref, *, eps, hw, c):
    # x_ref: (1, C, HW). Accumulate statistics in f32 regardless of input dtype.
    xf = x_ref[...].astype(jnp.float32)

    # ---- Reduction pass 1: per-channel sums over the spatial (lane) axis ----
    ch_sum = jnp.sum(xf, axis=-1, keepdims=True)                      # (1, C, 1)
    in_mean = ch_sum * (1.0 / hw)                                     # (1, C, 1)

    # ---- Reduction pass 2: centered sum-of-squares (numerically stable) ----
    centered = xf - in_mean                                           # (1, C, HW)
    ch_csq = jnp.sum(centered * centered, axis=-1, keepdims=True)     # (1, C, 1)
    in_var = ch_csq * (1.0 / (hw - 1))                                # unbiased (torch.var default)

    # ---- LayerNorm stats derived exactly from per-channel partials (no 3rd slab pass) ----
    # sum_{c,i}(x - ln_mean)^2 == sum_c [ csq_c + hw*(in_mean_c - ln_mean)^2 ]
    ln_mean = jnp.sum(ch_sum, axis=-2, keepdims=True) * (1.0 / (c * hw))     # (1, 1, 1)
    dm = in_mean - ln_mean
    ln_csq = jnp.sum(ch_csq + hw * (dm * dm), axis=-2, keepdims=True)        # (1, 1, 1)
    ln_var = ln_csq * (1.0 / (c * hw - 1))

    # rsqrt on tiny (1,C,1)/(1,1,1) tensors -> EUP slot; no full-slab divide.
    inv_in = lax.rsqrt(in_var + eps)                                  # (1, C, 1)
    inv_ln = lax.rsqrt(ln_var + eps)                                  # (1, 1, 1)

    rho = rho_ref[...].astype(jnp.float32)                            # (1, C, 1)
    gamma = gamma_ref[...].astype(jnp.float32)                        # (1, C, 1)
    beta = beta_ref[...].astype(jnp.float32)                          # (1, C, 1)

    # Fold blend + affine into per-channel coefficients:
    #   out = x*A + B,  A = gamma*(rho*inv_in + (1-rho)*inv_ln)
    #                   B = beta - gamma*(rho*in_mean*inv_in + (1-rho)*ln_mean*inv_ln)
    scale = rho * inv_in + (1.0 - rho) * inv_ln                       # (1, C, 1)
    shift = rho * (in_mean * inv_in) + (1.0 - rho) * (ln_mean * inv_ln)
    a = gamma * scale                                                 # (1, C, 1)
    b = beta - gamma * shift                                          # (1, C, 1)

    # Reuse the already-materialized `centered` slab for the single fused apply:
    #   x*a + b == centered*a + (in_mean*a + b)
    b_centered = in_mean * a + b
    o_ref[...] = (centered * a + b_centered).astype(o_ref.dtype)


def adailn_forward(x, gamma, beta, rho, eps=1e-5):
    """x: (N, C, H, W); gamma, beta: (N, C); rho: (1, C, 1, 1)."""
    N, C, H, W = x.shape
    HW = H * W

    # Keep HW as the (full) last block dim -> lane-dense loads/stores; no spatial padding
    # (padding would corrupt the statistics).
    x_flat = x.reshape(N, C, HW)
    gamma_r = gamma.reshape(N, C, 1)
    beta_r = beta.reshape(N, C, 1)
    rho_r = rho.reshape(1, C, 1)

    # VMEM budget: double-buffered input + output blocks plus ~2 f32 slab temporaries.
    itemsize = jnp.dtype(x.dtype).itemsize
    slab_bytes = C * HW * itemsize
    vmem_needed = 4 * slab_bytes + 2 * C * HW * 4 + (1 << 20)
    vmem_limit = int(min(max(vmem_needed, 32 * 1024 * 1024), 64 * 1024 * 1024))
    # TODO(synk): for very large decoder slabs (C*HW*4B beyond ~16 MiB) tile the HW axis in
    # the grid with a two-phase (accumulate partials, then re-stream and apply) structure so
    # it fits v7x's 64 MiB VMEM and gives both TensorCores work when N is small.

    kernel = functools.partial(_adailn_kernel, eps=eps, hw=HW, c=C)

    out_flat = pl.pallas_call(
        kernel,
        out_shape=jax.ShapeDtypeStruct((N, C, HW), x.dtype),
        grid_spec=pltpu.PrefetchScalarGridSpec(
            num_scalar_prefetch=0,
            grid=(N,),
            in_specs=[
                pl.BlockSpec((1, C, HW), lambda n: (n, 0, 0)),
                pl.BlockSpec((1, C, 1), lambda n: (n, 0, 0)),
                pl.BlockSpec((1, C, 1), lambda n: (n, 0, 0)),
                pl.BlockSpec((1, C, 1), lambda n: (0, 0, 0)),
            ],
            out_specs=pl.BlockSpec((1, C, HW), lambda n: (n, 0, 0)),
        ),
        compiler_params=pltpu.CompilerParams(
            dimension_semantics=("parallel",),
            vmem_limit_bytes=vmem_limit,
        ),
    )(x_flat, gamma_r, beta_r, rho_r)

    return out_flat.reshape(N, C, H, W)


def adailn_reference(x, gamma, beta, rho, eps=1e-5):
    """Pure-JAX reference matching the PyTorch forward (unbiased variance)."""
    x = x.astype(jnp.float32)
    in_mean = jnp.mean(x, axis=(2, 3), keepdims=True)
    in_var = jnp.var(x, axis=(2, 3), keepdims=True, ddof=1)
    ln_mean = jnp.mean(x, axis=(1, 2, 3), keepdims=True)
    ln_var = jnp.var(x, axis=(1, 2, 3), keepdims=True, ddof=1)
    out_in = (x - in_mean) / jnp.sqrt(in_var + eps)
    out_ln = (x - ln_mean) / jnp.sqrt(ln_var + eps)
    out = rho * out_in + (1.0 - rho) * out_ln
    return out * gamma[:, :, None, None] + beta[:, :, None, None]


if __name__ == "__main__":
    N, C, H, W = 2, 4, 16, 16
    key = jax.random.PRNGKey(0)
    kx, kg, kb = jax.random.split(key, 3)

    x = jax.random.normal(kx, (N, C, H, W), dtype=jnp.float32)
    gamma = jax.random.normal(kg, (N, C), dtype=jnp.float32)
    beta = jax.random.normal(kb, (N, C), dtype=jnp.float32)
    # Parameter init from adaILN.__init__: rho = ones(1, C, 1, 1) * 0.9
    rho = jnp.ones((1, C, 1, 1), dtype=jnp.float32) * 0.9

    out = adailn_forward(x, gamma, beta, rho)
    out = jax.block_until_ready(out)

    ref = adailn_reference(x, gamma, beta, rho)
    assert out.shape == (N, C, H, W)
    assert jnp.allclose(out, ref, atol=1e-4, rtol=1e-4), "mismatch vs reference"

    print("KERNEL_OK")
</pallas_src>

<mosaic_0001>
module attributes {stable_mosaic.version = 11 : i64} {
  func.func @_adailn_kernel(%arg0: i32, %arg1: memref<1x4x256xf32, #tpu.memory_space<vmem>>, %arg2: memref<1x4x1xf32, #tpu.memory_space<vmem>>, %arg3: memref<1x4x1xf32, #tpu.memory_space<vmem>>, %arg4: memref<1x4x1xf32, #tpu.memory_space<vmem>>, %arg5: memref<1x4x256xf32, #tpu.memory_space<vmem>>) attributes {dimension_semantics = [#tpu.dimension_semantics<parallel>], iteration_bounds = array<i64: 2>, scalar_prefetch = 0 : i64, scratch_operands = 0 : i64, tpu.core_type = #tpu.core_type<tc>, window_params = [{transform_indices = @transform_0, window_bounds = array<i64: 1, 4, 256>}, {transform_indices = @transform_1, window_bounds = array<i64: 1, 4, 1>}, {transform_indices = @transform_2, window_bounds = array<i64: 1, 4, 1>}, {pipeline_mode = #tpu.pipeline_mode<synchronous>, transform_indices = @transform_3, window_bounds = array<i64: 1, 4, 1>}, {transform_indices = @transform_4, window_bounds = array<i64: 1, 4, 256>}]} {
    %c0 = arith.constant 0 : index
    %c0_0 = arith.constant 0 : index
    %c0_1 = arith.constant 0 : index
    %0 = vector.load %arg1[%c0, %c0_0, %c0_1] : memref<1x4x256xf32, #tpu.memory_space<vmem>>, vector<1x4x256xf32>
    %cst = arith.constant dense<0.000000e+00> : vector<1x4xf32>
    %1 = vector.multi_reduction <add>, %0, %cst [2] : vector<1x4x256xf32> to vector<1x4xf32>
    %2 = vector.shape_cast %1 : vector<1x4xf32> to vector<1x4x1xf32>
    %cst_2 = arith.constant 3.906250e-03 : f32
    %3 = vector.broadcast %cst_2 : f32 to vector<1x4x1xf32>
    %4 = arith.mulf %2, %3 : vector<1x4x1xf32>
    %5 = vector.broadcast %4 : vector<1x4x1xf32> to vector<1x4x256xf32>
    %6 = arith.subf %0, %5 : vector<1x4x256xf32>
    %7 = arith.mulf %6, %6 : vector<1x4x256xf32>
    %cst_3 = arith.constant dense<0.000000e+00> : vector<1x4xf32>
    %8 = vector.multi_reduction <add>, %7, %cst_3 [2] : vector<1x4x256xf32> to vector<1x4xf32>
    %9 = vector.shape_cast %8 : vector<1x4xf32> to vector<1x4x1xf32>
    %cst_4 = arith.constant 0.00392156886 : f32
    %10 = vector.broadcast %cst_4 : f32 to vector<1x4x1xf32>
    %11 = arith.mulf %9, %10 : vector<1x4x1xf32>
    %cst_5 = arith.constant dense<0.000000e+00> : vector<1x1xf32>
    %12 = vector.multi_reduction <add>, %2, %cst_5 [1] : vector<1x4x1xf32> to vector<1x1xf32>
    %13 = vector.shape_cast %12 : vector<1x1xf32> to vector<1x1x1xf32>
    %cst_6 = arith.constant 9.765625E-4 : f32
    %14 = vector.broadcast %cst_6 : f32 to vector<1x1x1xf32>
    %15 = arith.mulf %13, %14 : vector<1x1x1xf32>
    %16 = vector.broadcast %15 : vector<1x1x1xf32> to vector<1x4x1xf32>
    %17 = arith.subf %4, %16 : vector<1x4x1xf32>
    %18 = arith.mulf %17, %17 : vector<1x4x1xf32>
    %cst_7 = arith.constant 2.560000e+02 : f32
    %19 = vector.broadcast %cst_7 : f32 to vector<1x4x1xf32>
    %20 = arith.mulf %19, %18 : vector<1x4x1xf32>
    %21 = arith.addf %9, %20 : vector<1x4x1xf32>
    %cst_8 = arith.constant dense<0.000000e+00> : vector<1x1xf32>
    %22 = vector.multi_reduction <add>, %21, %cst_8 [1] : vector<1x4x1xf32> to vector<1x1xf32>
    %23 = vector.shape_cast %22 : vector<1x1xf32> to vector<1x1x1xf32>
    %cst_9 = arith.constant 9.77517105E-4 : f32
    %24 = vector.broadcast %cst_9 : f32 to vector<1x1x1xf32>
    %25 = arith.mulf %23, %24 : vector<1x1x1xf32>
    %cst_10 = arith.constant 9.99999974E-6 : f32
    %26 = vector.broadcast %cst_10 : f32 to vector<1x4x1xf32>
    %27 = arith.addf %11, %26 : vector<1x4x1xf32>
    %28 = math.rsqrt %27 : vector<1x4x1xf32>
    %cst_11 = arith.constant 9.99999974E-6 : f32
    %29 = vector.broadcast %cst_11 : f32 to vector<1x1x1xf32>
    %30 = arith.addf %25, %29 : vector<1x1x1xf32>
    %31 = math.rsqrt %30 : vector<1x1x1xf32>
    %c0_12 = arith.constant 0 : index
    %c0_13 = arith.constant 0 : index
    %c0_14 = arith.constant 0 : index
    %32 = vector.load %arg4[%c0_12, %c0_13, %c0_14] : memref<1x4x1xf32, #tpu.memory_space<vmem>>, vector<1x4x1xf32>
    %c0_15 = arith.constant 0 : index
    %c0_16 = arith.constant 0 : index
    %c0_17 = arith.constant 0 : index
    %33 = vector.load %arg2[%c0_15, %c0_16, %c0_17] : memref<1x4x1xf32, #tpu.memory_space<vmem>>, vector<1x4x1xf32>
    %c0_18 = arith.constant 0 : index
    %c0_19 = arith.constant 0 : index
    %c0_20 = arith.constant 0 : index
    %34 = vector.load %arg3[%c0_18, %c0_19, %c0_20] : memref<1x4x1xf32, #tpu.memory_space<vmem>>, vector<1x4x1xf32>
    %35 = arith.mulf %32, %28 : vector<1x4x1xf32>
    %cst_21 = arith.constant 1.000000e+00 : f32
    %36 = vector.broadcast %cst_21 : f32 to vector<1x4x1xf32>
    %37 = arith.subf %36, %32 : vector<1x4x1xf32>
    %38 = vector.broadcast %31 : vector<1x1x1xf32> to vector<1x4x1xf32>
    %39 = arith.mulf %37, %38 : vector<1x4x1xf32>
    %40 = arith.addf %35, %39 : vector<1x4x1xf32>
    %41 = arith.mulf %4, %28 : vector<1x4x1xf32>
    %42 = arith.mulf %32, %41 : vector<1x4x1xf32>
    %cst_22 = arith.constant 1.000000e+00 : f32
    %43 = vector.broadcast %cst_22 : f32 to vector<1x4x1xf32>
    %44 = arith.subf %43, %32 : vector<1x4x1xf32>
    %45 = arith.mulf %15, %31 : vector<1x1x1xf32>
    %46 = vector.broadcast %45 : vector<1x1x1xf32> to vector<1x4x1xf32>
    %47 = arith.mulf %44, %46 : vector<1x4x1xf32>
    %48 = arith.addf %42, %47 : vector<1x4x1xf32>
    %49 = arith.mulf %33, %40 : vector<1x4x1xf32>
    %50 = arith.mulf %33, %48 : vector<1x4x1xf32>
    %51 = arith.subf %34, %50 : vector<1x4x1xf32>
    %52 = arith.mulf %4, %49 : vector<1x4x1xf32>
    %53 = arith.addf %52, %51 : vector<1x4x1xf32>
    %54 = vector.broadcast %49 : vector<1x4x1xf32> to vector<1x4x256xf32>
    %55 = arith.mulf %6, %54 : vector<1x4x256xf32>
    %56 = vector.broadcast %53 : vector<1x4x1xf32> to vector<1x4x256xf32>
    %57 = arith.addf %55, %56 : vector<1x4x256xf32>
    %c0_23 = arith.constant 0 : index
    %c0_24 = arith.constant 0 : index
    %c0_25 = arith.constant 0 : index
    %58 = vector.load %arg5[%c0_23, %c0_24, %c0_25] : memref<1x4x256xf32, #tpu.memory_space<vmem>>, vector<1x4x256xf32>
    tpu.vector_store %arg5[%c0_23, %c0_24, %c0_25], %57 {strides = array<i32>} : memref<1x4x256xf32, #tpu.memory_space<vmem>>, vector<1x4x256xf32>,
    return
  }
  func.func @transform_0(%arg0: i32) -> (i32, i32, i32) {
    %c0_i32 = arith.constant 0 : i32
    %c0_i32_0 = arith.constant 0 : i32
    %c0_i32_1 = arith.constant 0 : i32
    return %arg0, %c0_i32, %c0_i32_0 : i32, i32, i32
  }
  func.func @transform_1(%arg0: i32) -> (i32, i32, i32) {
    %c0_i32 = arith.constant 0 : i32
    %c0_i32_0 = arith.constant 0 : i32
    %c0_i32_1 = arith.constant 0 : i32
    return %arg0, %c0_i32, %c0_i32_0 : i32, i32, i32
  }
  func.func @transform_2(%arg0: i32) -> (i32, i32, i32) {
    %c0_i32 = arith.constant 0 : i32
    %c0_i32_0 = arith.constant 0 : i32
    %c0_i32_1 = arith.constant 0 : i32
    return %arg0, %c0_i32, %c0_i32_0 : i32, i32, i32
  }
  func.func @transform_3(%arg0: i32) -> (i32, i32, i32) {
    %c0_i32 = arith.constant 0 : i32
    %c0_i32_0 = arith.constant 0 : i32
    %c0_i32_1 = arith.constant 0 : i32
    %c0_i32_2 = arith.constant 0 : i32
    return %c0_i32, %c0_i32_0, %c0_i32_1 : i32, i32, i32
  }
  func.func @transform_4(%arg0: i32) -> (i32, i32, i32) {
    %c0_i32 = arith.constant 0 : i32
    %c0_i32_0 = arith.constant 0 : i32
    %c0_i32_1 = arith.constant 0 : i32
    return %arg0, %c0_i32, %c0_i32_0 : i32, i32, i32
  }
}

</mosaic_0001>

<llo_original>
// kernel: tpu_custom_call.1
$region0: #{tpu_custom_call.1}
  #allocation0 [shape = 'u32[]', space=smem, size = 0x4, offset = 0x4, fixed_abs, tag = 'smem constant byte address 0x4 - core index']
  #allocation1 [shape = 'u32[144,128]{1,0:T(1,128)}', space=vmem, size = 0x12000, scoped, tag = 'internal scratch']
  %s0 = inlined_call_operand.vmem [shape: f32[2,4,256], index: 0, kind: input, shape index: {}]
  %s1 = inlined_call_operand.vmem [shape: f32[2,4,1], index: 1, kind: input, shape index: {}]
  %s2 = inlined_call_operand.vmem [shape: f32[2,4,1], index: 2, kind: input, shape index: {}]
  %s3 = inlined_call_operand.vmem [shape: f32[1,4,1], index: 3, kind: input, shape index: {}]
  %s4 = inlined_call_operand.hbm [shape: f32[2,4,256], index: 4, kind: output, shape index: {}]
  %s5 = sld [smem:[#allocation0]]
  $region49: #{tpu_custom_call.1} parent=0
    _
  %s7 = ssub.s32 1, %s5
  %s8 = scalar_select 0, %s7, %s5
  $region1: #{tpu_custom_call.1} parent=0
    #allocation2 [shape = 'u8[8192]{0}', space=vmem, size = 0x2000, scoped, tag = 'output window, operand 0']
    #allocation3 [shape = 's32[2]{0}', space=sflag, size = 0x8, scoped, tag = 'scoped memory for tpu_custom_call.1']
    %9 = vsyncpa [#allocation3], 0
    %s10 = scalar_lea.sflag [#allocation3], 1
    %11 = vsyncpa %s10, 0
    loop: start=0, step=1, limit=4
    $region2: #{tpu_custom_call.1} parent=1 // loop_pre_header
      _
    $region3: #{tpu_custom_call.1} parent=1 // loop_header
      %s13 = sphi 0, %s17
      %p14 = scmp.ge.s32.totalorder %s13, 4
      %s23 = sphi 0, %s25
      %s26 = sphi 0, %s23
      %s27 = sphi 0, %s26
      %s43 = sphi 0, %s27
      %s49 = sphi 0, %s51
      %s52 = sphi 0, %s49
      %s53 = sphi 0, %s52
      %s69 = sphi 0, %s53
      %s75 = sphi 0, %s77
      %s78 = sphi 0, %s75
      %s79 = sphi 0, %s78
      %s95 = sphi 0, %s79
      %s99 = sphi 0, %s99
      %s101 = sphi 0, %s99
      %s102 = sphi 0, %s101
      %s116 = sphi 0, %s102
      %s122 = sphi 0, %s124
      %s125 = sphi 0, %s122
      %s126 = sphi 0, %s125
      %s142 = sphi 0, %s126
    $region4: #{tpu_custom_call.1} parent=1 // loop_header_branch
      %16 = sbr.rel (%p14) target = $region8
    $region5: #{tpu_custom_call.1} parent=1 // loop_body
      %s18 = ssub.s32 %s13, 1
      %s19 = ssub.s32 %s13, 2
      %s20 = sadd.s32 %s13, 1
      %s21 = ssub.s32 %s13, %s20
      %p22 = scmp.eq.s32.totalorder %s21, 0
      %s24 = sadd.s32 %s23, 1
      %s25 = scalar_select %p22, %s23, %s24
      %p28 = pneg %p22
      %p29 = scmp.eq.s32.totalorder %s13, 1
      %p30 = por %p28, %p29
      %p31 = scmp.ne.s32.totalorder %s23, %s26
      %p32 = scmp.eq.s32.totalorder %s13, 0
      %p33 = por %p31, %p32
      %p34 = scmp.ne.s32.totalorder %s23, %s26
      %p35 = scmp.eq.s32.totalorder %s18, 1
      %p36 = por %p34, %p35
      %p37 = scmp.ne.s32.totalorder %s26, %s27
      %p38 = scmp.eq.s32.totalorder %s18, 0
      %p39 = por %p37, %p38
      %p40 = scmp.ne.s32.totalorder %s26, %s27
      %p41 = scmp.eq.s32.totalorder %s19, 1
      %p42 = por %p40, %p41
      %p44 = scmp.ne.s32.totalorder %s27, %s43
      %p45 = scmp.eq.s32.totalorder %s19, 0
      %p46 = por %p44, %p45
      %s47 = ssub.s32 %s13, %s20
      %p48 = scmp.eq.s32.totalorder %s47, 0
      %s50 = sadd.s32 %s49, 1
      %s51 = scalar_select %p48, %s49, %s50
      %p54 = pneg %p48
      %p55 = scmp.eq.s32.totalorder %s13, 1
      %p56 = por %p54, %p55
      %p57 = scmp.ne.s32.totalorder %s49, %s52
      %p58 = scmp.eq.s32.totalorder %s13, 0
      %p59 = por %p57, %p58
      %p60 = scmp.ne.s32.totalorder %s49, %s52
      %p61 = scmp.eq.s32.totalorder %s18, 1
      %p62 = por %p60, %p61
      %p63 = scmp.ne.s32.totalorder %s52, %s53
      %p64 = scmp.eq.s32.totalorder %s18, 0
      %p65 = por %p63, %p64
      %p66 = scmp.ne.s32.totalorder %s52, %s53
      %p67 = scmp.eq.s32.totalorder %s19, 1
      %p68 = por %p66, %p67
      %p70 = scmp.ne.s32.totalorder %s53, %s69
      %p71 = scmp.eq.s32.totalorder %s19, 0
      %p72 = por %p70, %p71
      %s73 = ssub.s32 %s13, %s20
      %p74 = scmp.eq.s32.totalorder %s73, 0
      %s76 = sadd.s32 %s75, 1
      %s77 = scalar_select %p74, %s75, %s76
      %p80 = pneg %p74
      %p81 = scmp.eq.s32.totalorder %s13, 1
      %p82 = por %p80, %p81
      %p83 = scmp.ne.s32.totalorder %s75, %s78
      %p84 = scmp.eq.s32.totalorder %s13, 0
      %p85 = por %p83, %p84
      %p86 = scmp.ne.s32.totalorder %s75, %s78
      %p87 = scmp.eq.s32.totalorder %s18, 1
      %p88 = por %p86, %p87
      %p89 = scmp.ne.s32.totalorder %s78, %s79
      %p90 = scmp.eq.s32.totalorder %s18, 0
      %p91 = por %p89, %p90
      %p92 = scmp.ne.s32.totalorder %s78, %s79
      %p93 = scmp.eq.s32.totalorder %s19, 1
      %p94 = por %p92, %p93
      %p96 = scmp.ne.s32.totalorder %s79, %s95
      %p97 = scmp.eq.s32.totalorder %s19, 0
      %p98 = por %p96, %p97
      %s100 = sadd.s32 %s99, 1
      %p103 = scmp.eq.s32.totalorder %s13, 1
      %p104 = scmp.ne.s32.totalorder %s99, %s101
      %p105 = scmp.eq.s32.totalorder %s13, 0
      %p106 = por %p104, %p105
      %p107 = scmp.ne.s32.totalorder %s99, %s101
      %p108 = scmp.eq.s32.totalorder %s18, 1
      %p109 = por %p107, %p108
      %p110 = scmp.ne.s32.totalorder %s101, %s102
      %p111 = scmp.eq.s32.totalorder %s18, 0
      %p112 = por %p110, %p111
      %p113 = scmp.ne.s32.totalorder %s101, %s102
      %p114 = scmp.eq.s32.totalorder %s19, 1
      %p115 = por %p113, %p114
      %p117 = scmp.ne.s32.totalorder %s102, %s116
      %p118 = scmp.eq.s32.totalorder %s19, 0
      %p119 = por %p117, %p118
      %s120 = ssub.s32 %s13, %s20
      %p121 = scmp.eq.s32.totalorder %s120, 0
      %s123 = sadd.s32 %s122, 1
      %s124 = scalar_select %p121, %s122, %s123
      %p127 = pneg %p121
      %p128 = scmp.eq.s32.totalorder %s13, 1
      %p129 = por %p127, %p128
      %p130 = scmp.ne.s32.totalorder %s122, %s125
      %p131 = scmp.eq.s32.totalorder %s13, 0
      %p132 = por %p130, %p131
      %p133 = scmp.ne.s32.totalorder %s122, %s125
      %p134 = scmp.eq.s32.totalorder %s18, 1
      %p135 = por %p133, %p134
      %p136 = scmp.ne.s32.totalorder %s125, %s126
      %p137 = scmp.eq.s32.totalorder %s18, 0
      %p138 = por %p136, %p137
      %p139 = scmp.ne.s32.totalorder %s125, %s126
      %p140 = scmp.eq.s32.totalorder %s19, 1
      %p141 = por %p139, %p140
      %p143 = scmp.ne.s32.totalorder %s126, %s142
      %p144 = scmp.eq.s32.totalorder %s19, 0
      %p145 = por %p143, %p144
      %p146 = scmp.le.s32.totalorder 1, %s13
      %p147 = scmp.lt.s32.totalorder %s13, 3
      %p148 = pnand %p146, %p147
      %p149 = pneg %p148
      // Predicated region
      $region9: #{tpu_custom_call.1} parent=5 // pred_check
        _
      $region10: #{tpu_custom_call.1} parent=5 // pred_check_branch
        %151 = sbr.rel (%p148) target = $region12
      $region11: #{tpu_custom_call.1} parent=5 // pred_region
        %s152 = ssub.s32 %s13, 1
        // Predicated region
        $region13: #{tpu_custom_call.1} parent=11 // pred_check
          %p153 = pneg %p112
        $region14: #{tpu_custom_call.1} parent=11 // pred_check_branch
          %155 = sbr.rel (%p153) target = $region16
        $region15: #{tpu_custom_call.1} parent=11 // pred_region
          _
        $region16: #{tpu_custom_call.1} parent=11 // pred_fallthru
          _
      $region12: #{tpu_custom_call.1} parent=5 // pred_fallthru
        _
      %p156 = scmp.lt.s32.totalorder %s13, 2
      // Predicated region
      $region17: #{tpu_custom_call.1} parent=5 // pred_check
        %p157 = pneg %p156
      $region18: #{tpu_custom_call.1} parent=5 // pred_check_branch
        %159 = sbr.rel (%p157) target = $region20
      $region19: #{tpu_custom_call.1} parent=5 // pred_region
        // Predicated region
        $region21: #{tpu_custom_call.1} parent=19 // pred_check
          %p160 = pneg %p33
        $region22: #{tpu_custom_call.1} parent=19 // pred_check_branch
          %162 = sbr.rel (%p160) target = $region24
        $region23: #{tpu_custom_call.1} parent=19 // pred_region
          %p163 = scmp.lt.s32.totalorder %s13, 1
          %s164 = scalar_select %p163, %s13, 1
          %s165 = smul.addr %s164, 2
          %s166 = smul.addr %s165, 4
          %s167 = scalar_lea.vmem %s0, %s166
        $region24: #{tpu_custom_call.1} parent=19 // pred_fallthru
          _
        // Predicated region
        $region25: #{tpu_custom_call.1} parent=19 // pred_check
          %p168 = pneg %p59
        $region26: #{tpu_custom_call.1} parent=19 // pred_check_branch
          %170 = sbr.rel (%p168) target = $region28
        $region27: #{tpu_custom_call.1} parent=19 // pred_region
          %p171 = scmp.lt.s32.totalorder %s13, 1
          %s172 = scalar_select %p171, %s13, 1
          %s173 = smul.addr %s172, 4
          %s174 = scalar_lea.vmem %s1, %s173
        $region28: #{tpu_custom_call.1} parent=19 // pred_fallthru
          _
        // Predicated region
        $region29: #{tpu_custom_call.1} parent=19 // pred_check
          %p175 = pneg %p85
        $region30: #{tpu_custom_call.1} parent=19 // pred_check_branch
          %177 = sbr.rel (%p175) target = $region32
        $region31: #{tpu_custom_call.1} parent=19 // pred_region
          %p178 = scmp.lt.s32.totalorder %s13, 1
          %s179 = scalar_select %p178, %s13, 1
          %s180 = smul.addr %s179, 4
          %s181 = scalar_lea.vmem %s2, %s180
        $region32: #{tpu_custom_call.1} parent=19 // pred_fallthru
          _
      $region20: #{tpu_custom_call.1} parent=5 // pred_fallthru
        _
      %p182 = scmp.le.s32.totalorder 1, %s13
      %p183 = scmp.lt.s32.totalorder %s13, 3
      %p184 = pnand %p182, %p183
      %p185 = pneg %p184
      // Predicated region
      $region33: #{tpu_custom_call.1} parent=5 // pred_check
        _
      $region34: #{tpu_custom_call.1} parent=5 // pred_check_branch
        %187 = sbr.rel (%p184) target = $region36
      $region35: #{tpu_custom_call.1} parent=5 // pred_region
        %s188 = ssub.s32 %s13, 1
        %p189 = scmp.lt.s32.totalorder %s18, 1
        %s190 = scalar_select %p189, %s18, 1
        %s191 = smul.addr %s190, 2
        %s192 = smul.addr %s191, 4
        %s193 = scalar_lea.vmem %s0, %s192
        %p194 = pneg %p39
        %p195 = pneg %p36
        %p196 = scmp.lt.s32.totalorder %s18, 1
        %s197 = scalar_select %p196, %s18, 1
        %s198 = smul.addr %s197, 4
        %s199 = scalar_lea.vmem %s1, %s198
        %p200 = pneg %p65
        %p201 = pneg %p62
        %p202 = scmp.lt.s32.totalorder %s18, 1
        %s203 = scalar_select %p202, %s18, 1
        %s204 = smul.addr %s203, 4
        %s205 = scalar_lea.vmem %s2, %s204
        %p206 = pneg %p91
        %p207 = pneg %p88
        %p208 = pneg %p112
        %p209 = pneg %p109
        %p210 = pneg %p138
        %p211 = pneg %p135
        %s212 = sand.u32 %s125, 1
        %s213 = scalar_lea.sflag [#allocation3], %s212
        %s214 = sand.u32 %s125, 1
        %s215 = smul.addr %s214, 8
        %s216 = scalar_lea.vmem [#allocation2], %s215
        %p217 = scmp.lt.s32.totalorder %s18, 1
        %s218 = scalar_select %p217, %s18, 1
        %s219 = smul.addr %s218, 2
        %s220 = smul.addr %s219, 4
        %s221 = scalar_lea.vmem %s0, %s220
        %p222 = scmp.lt.s32.totalorder %s18, 1
        %s223 = scalar_select %p222, %s18, 1
        %s224 = smul.addr %s223, 4
        %s225 = scalar_lea.vmem %s1, %s224
        %p226 = scmp.lt.s32.totalorder %s18, 1
        %s227 = scalar_select %p226, %s18, 1
        %s228 = smul.addr %s227, 4
        %s229 = scalar_lea.vmem %s2, %s228
        %v230 = vld [vmem:[%s221] sm:$0xff]
        %v232 = vcombine.high %v230, %v230
        %vm234 = vcmask 1043456
        %v235 = vsel %vm234, %v230, 0.0
        %v236 = vsel %vm234, %v232, 0.0
        %v237 = vadd.f32 %v235, %v236
        %238 = vadd.xlane.f32.xlu0 %v237
        %v239 = vpop.xlane.xlu0 %238
        %v240 = vmul.f32 %v239, 0.00390625
        %v243 = vunpack.c.l.s4 839922192
        %v244 = vunpack.c.0.s8 %v243
        %v245 = vlaneseq
        %v246 = vshrl.u32 %v245, 7
        %v247 = vsub.s32 %v244, %v246
        %v248 = vrot.slane %v240, %v247
        %v250 = vsub.f32 %v230, %v248
        %v251 = vmul.f32 %v250, %v250
        %v253 = vcombine.high %v251, %v251
        %v255 = vsel %vm234, %v251, 0.0
        %v256 = vsel %vm234, %v253, 0.0
        %v257 = vadd.f32 %v255, %v256
        %258 = vadd.xlane.f32.xlu0 %v257
        %v259 = vpop.xlane.xlu0 %258
        %v260 = vmul.f32 %v259, 0.003921569
        %v261 = vsel %vm234, %v239, 0.0
        %v262 = vrot.slane %v261, 4
        %v263 = vadd.f32 %v261, %v262
        %v264 = vrot.slane %v263, 2
        %v265 = vadd.f32 %v263, %v264
        %v266 = vrot.slane %v265, 1
        %v267 = vadd.f32 %v265, %v266
        %v268 = vmul.f32 %v267, 0.0009765625
        %v269 = vsub.f32 %v240, %v268
        %v270 = vmul.f32 %v269, %v269
        %v271 = vmul.f32 %v270, 256.0
        %v272 = vadd.f32 %v259, %v271
        %v273 = vsel %vm234, %v272, 0.0
        %v274 = vrot.slane %v273, 4
        %v275 = vadd.f32 %v273, %v274
        %v276 = vrot.slane %v275, 2
        %v277 = vadd.f32 %v275, %v276
        %v278 = vrot.slane %v277, 1
        %v279 = vadd.f32 %v277, %v278
        %v280 = vmul.f32 %v279, 0.0009775171
        %v281 = vadd.f32 %v260, 1e-05
        %v282 = vrsqrt.pop %v281
        %v283 = vadd.f32 %v280, 1e-05
        %v284 = vrsqrt.pop %v283
        %v285 = vld [vmem:[%s3] sm:$0xf]
        %v286 = vld [vmem:[%s225] sm:$0xf]
        %v287 = vld [vmem:[%s229] sm:$0xf]
        %v288 = vmul.f32 %v285, %v282
        %v289 = vsub.f32 1.0, %v285
        %v290 = vmul.f32 %v289, %v284
        %v291 = vadd.f32 %v288, %v290
        %v292 = vmul.f32 %v240, %v282
        %v293 = vmul.f32 %v285, %v292
        %v294 = vmul.f32 %v268, %v284
        %v295 = vmul.f32 %v289, %v294
        %v296 = vadd.f32 %v293, %v295
        %v297 = vmul.f32 %v286, %v291
        %v298 = vmul.f32 %v286, %v296
        %v299 = vsub.f32 %v287, %v298
        %v300 = vmul.f32 %v240, %v297
        %v301 = vadd.f32 %v300, %v299
        %303 = vset.pattern.permute.xlu0 0
        %304 = vperm.xlu0 %303, %v297
        %v305 = vpop.permute.xlu0 %304
        %v307 = vunpack.c.l.s4 839922192
        %v308 = vunpack.c.0.s8 %v307
        %v309 = vlaneseq
        %v310 = vshrl.u32 %v309, 7
        %v311 = vsub.s32 %v308, %v310
        %v312 = vrot.slane %v305, %v311
        %v314 = vmul.f32 %v250, %v312
        %316 = vset.pattern.permute.xlu0 0
        %317 = vperm.xlu0 %316, %v301
        %v318 = vpop.permute.xlu0 %317
        %v320 = vunpack.c.l.s4 839922192
        %v321 = vunpack.c.0.s8 %v320
        %v322 = vlaneseq
        %v323 = vshrl.u32 %v322, 7
        %v324 = vsub.s32 %v321, %v323
        %v325 = vrot.slane %v318, %v324
        %v327 = vadd.f32 %v314, %v325
        %328 = vst [vmem:[%s216] sm:$0xff] %v327
        %s329 = sand.u32 %s125, 1
        %s330 = scalar_lea.sflag [#allocation3], %s329
        %s331 = sand.u32 %s125, 1
        %s332 = smul.addr %s331, 8
        %s333 = scalar_lea.vmem [#allocation2], %s332
        // Predicated region
        $region37: #{tpu_custom_call.1} parent=35 // pred_check
          %p334 = pneg %p135
        $region38: #{tpu_custom_call.1} parent=35 // pred_check_branch
          %336 = sbr.rel (%p334) target = $region40
        $region39: #{tpu_custom_call.1} parent=35 // pred_region
          %s338 = ssub.s32 128, 128
          %339 = vsyncadd %s330, %s338
          %s340 = smul.addr %s18, 2
          %s341 = smul.addr %s340, 64
          %s342 = scalar_lea.hbm %s4, %s341
          %s344 = sshll.u32 %s333, 4
          %s345 = int_to_ptr.vmem [resolvable:$true] %s344
          %347 = dma.vmem_to_hbm [thread:$0]  %s345, 128, %s342, %s330
        $region40: #{tpu_custom_call.1} parent=35 // pred_fallthru
          _
      $region36: #{tpu_custom_call.1} parent=5 // pred_fallthru
        _
      %p348 = scmp.le.s32.totalorder 2, %s13
      // Predicated region
      $region41: #{tpu_custom_call.1} parent=5 // pred_check
        %p349 = pneg %p348
      $region42: #{tpu_custom_call.1} parent=5 // pred_check_branch
        %351 = sbr.rel (%p349) target = $region44
      $region43: #{tpu_custom_call.1} parent=5 // pred_region
        %s352 = ssub.s32 %s13, 2
        // Predicated region
        $region45: #{tpu_custom_call.1} parent=43 // pred_check
          %p353 = pneg %p141
        $region46: #{tpu_custom_call.1} parent=43 // pred_check_branch
          %355 = sbr.rel (%p353) target = $region48
        $region47: #{tpu_custom_call.1} parent=43 // pred_region
          %s356 = sand.u32 %s126, 1
          %s357 = scalar_lea.sflag [#allocation3], %s356
          %s358 = sand.u32 %s126, 1
          %s359 = smul.addr %s358, 8
          %s360 = scalar_lea.vmem [#allocation2], %s359
          %361 = dma.done %s357, 128
        $region48: #{tpu_custom_call.1} parent=43 // pred_fallthru
          _
      $region44: #{tpu_custom_call.1} parent=5 // pred_fallthru
        _
    $region6: #{tpu_custom_call.1} parent=1 // loop_footer
      %s17 = sadd.s32 1, %s13
    $region7: #{tpu_custom_call.1} parent=1 // loop_footer_branch
      %12 = sbr.rel target = $region3
    $region8: #{tpu_custom_call.1} parent=1 // loop_exit
      _
    %362 = vsyncpa [#allocation3], 1
    %s363 = scalar_lea.sflag [#allocation3], 1
    %364 = vsyncpa %s363, 1

</llo_original>
